<compile_context>
chip_gen: v7x
topology: tpu7x:2x2x1
jax: 0.10.0
libtpu: 0.0.40
codegen_flags: <defaults>
</compile_context>

<pallas_src>
import jax
import jax.numpy as jnp
from jax import lax
from jax.experimental import pallas as pl
from jax.experimental.pallas import tpu as pltpu


def _lstm_recurrence_kernel(xg_ref, w_hh_ref, h_out_ref):
    """Single invocation. xg_ref: (T, Bp, 4H) precomputed input projections
    (bias folded in). w_hh_ref: (H, 4H). h_out_ref: (Bp, H) = last hidden."""
    T = xg_ref.shape[0]
    Bp = xg_ref.shape[1]
    H = h_out_ref.shape[1]

    # Hoist the recurrent weight load out of the unrolled time loop.
    w_hh = w_hh_ref[...]                                   # (H, 4H)

    def step(t, carry):
        h, c = carry
        # gates = (x_t @ W_ih^T + b) + h_{t-1} @ W_hh^T  -> (Bp, 4H)
        gates = xg_ref[t] + jnp.dot(h, w_hh, preferred_element_type=jnp.float32)
        # Full-vreg-width transcendentals (EUP), slice afterwards.
        s = jax.nn.sigmoid(gates)                          # (Bp, 4H)
        tg = jnp.tanh(gates)                               # (Bp, 4H)
        i_g = s[:, 0 * H:1 * H]
        f_g = s[:, 1 * H:2 * H]
        g_g = tg[:, 2 * H:3 * H]
        o_g = s[:, 3 * H:4 * H]
        c_new = f_g * c + i_g * g_g
        h_new = o_g * jnp.tanh(c_new)
        return (h_new, c_new)

    zeros = jnp.zeros((Bp, H), jnp.float32)
    h_last, _ = lax.fori_loop(0, T, step, (zeros, zeros), unroll=True)
    h_out_ref[...] = h_last


def lstm_soc_forward(x, w_ih, w_hh, b_ih, b_hh, w_fc, b_fc):
    """x: (B, T, I) float32.  PyTorch-layout params:
       w_ih (4H, I), w_hh (4H, H), b_ih (4H,), b_hh (4H,), w_fc (1, H), b_fc (1,).
       Returns (B,) float32 == fc(lstm_out[:, -1, :]).squeeze(-1)."""
    B, T, I = x.shape
    H = w_hh.shape[1]
    FH = 4 * H

    # Pad batch to the f32 sublane count (8) so vregs are full.
    Bp = max(8, ((B + 7) // 8) * 8)
    x_p = jnp.zeros((Bp, T, I), jnp.float32).at[:B].set(x.astype(jnp.float32))
    x_tm = jnp.transpose(x_p, (1, 0, 2))                   # (T, Bp, I) time-major

    # Batched, non-recurrent input projection for all time steps (one matmul),
    # with both biases folded in.
    b = (b_ih + b_hh).astype(jnp.float32)                  # (4H,)
    xg = jnp.einsum("tbi,gi->tbg", x_tm,
                    w_ih.astype(jnp.float32)) + b          # (T, Bp, 4H)
    w_hh_t = jnp.transpose(w_hh.astype(jnp.float32))       # (H, 4H)

    ce = pl.CostEstimate(
        flops=2 * T * Bp * H * FH + 10 * T * Bp * FH,
        transcendentals=T * Bp * (2 * FH + H),
        bytes_accessed=4 * (T * Bp * FH + H * FH + Bp * H),
    )

    h_last = pl.pallas_call(
        _lstm_recurrence_kernel,
        out_shape=jax.ShapeDtypeStruct((Bp, H), jnp.float32),
        grid=(1,),
        in_specs=[
            pl.BlockSpec((T, Bp, FH), lambda i: (0, 0, 0)),  # all gate inputs
            pl.BlockSpec((H, FH), lambda i: (0, 0)),         # W_hh^T
        ],
        out_specs=pl.BlockSpec((Bp, H), lambda i: (0, 0)),
        compiler_params=pltpu.CompilerParams(
            dimension_semantics=("arbitrary",)),
        cost_estimate=ce,
    )(xg, w_hh_t)

    # Linear(H, 1) + squeeze(-1) on the lane-dense hidden state (XLA fuses it).
    return (h_last[:B] @ w_fc.T.astype(jnp.float32) + b_fc)[:, 0]


def lstm_soc_reference(x, w_ih, w_hh, b_ih, b_hh, w_fc, b_fc):
    """Pure-JAX reference: direct translation of the PyTorch forward."""
    B, T, I = x.shape
    H = w_hh.shape[1]
    w_ih_t = w_ih.T                                        # (I, 4H)
    w_hh_t = w_hh.T                                        # (H, 4H)
    b = (b_ih + b_hh)[None, :]                             # (1, 4H)

    def step(carry, x_t):
        h, c = carry
        gates = x_t @ w_ih_t + h @ w_hh_t + b
        i_g = jax.nn.sigmoid(gates[:, 0 * H:1 * H])
        f_g = jax.nn.sigmoid(gates[:, 1 * H:2 * H])
        g_g = jnp.tanh(gates[:, 2 * H:3 * H])
        o_g = jax.nn.sigmoid(gates[:, 3 * H:4 * H])
        c = f_g * c + i_g * g_g
        h = o_g * jnp.tanh(c)
        return (h, c), None

    init = (jnp.zeros((B, H), jnp.float32), jnp.zeros((B, H), jnp.float32))
    (h_last, _), _ = lax.scan(step, init, jnp.transpose(x, (1, 0, 2)))
    return (h_last @ w_fc.T + b_fc)[:, 0]


if __name__ == "__main__":
    # Model hyperparameters from LSTMSOCModel.__init__
    INPUT_SIZE, HIDDEN = 3, 32
    B, T = 4, 8

    key = jax.random.PRNGKey(0)
    k_x, k_wih, k_whh, k_bih, k_bhh, k_wfc, k_bfc = jax.random.split(key, 7)

    # PyTorch-style uniform(-1/sqrt(H), 1/sqrt(H)) init, deterministic in-script.
    bound = 1.0 / jnp.sqrt(jnp.float32(HIDDEN))
    w_ih = jax.random.uniform(k_wih, (4 * HIDDEN, INPUT_SIZE), jnp.float32, -bound, bound)
    w_hh = jax.random.uniform(k_whh, (4 * HIDDEN, HIDDEN), jnp.float32, -bound, bound)
    b_ih = jax.random.uniform(k_bih, (4 * HIDDEN,), jnp.float32, -bound, bound)
    b_hh = jax.random.uniform(k_bhh, (4 * HIDDEN,), jnp.float32, -bound, bound)
    w_fc = jax.random.uniform(k_wfc, (1, HIDDEN), jnp.float32, -bound, bound)
    b_fc = jax.random.uniform(k_bfc, (1,), jnp.float32, -bound, bound)

    x = jax.random.normal(k_x, (B, T, INPUT_SIZE), jnp.float32)

    soc_pred = lstm_soc_forward(x, w_ih, w_hh, b_ih, b_hh, w_fc, b_fc)
    soc_pred = jax.block_until_ready(soc_pred)

    ref = lstm_soc_reference(x, w_ih, w_hh, b_ih, b_hh, w_fc, b_fc)
    assert soc_pred.shape == (B,), soc_pred.shape
    assert jnp.allclose(soc_pred, ref, atol=1e-4, rtol=1e-4), (soc_pred, ref)

    print("KERNEL_OK")
</pallas_src>

<mosaic_0001>
module attributes {stable_mosaic.version = 11 : i64} {
  func.func @_lstm_recurrence_kernel(%arg0: i32, %arg1: memref<8x8x128xf32, #tpu.memory_space<vmem>>, %arg2: memref<32x128xf32, #tpu.memory_space<vmem>>, %arg3: memref<8x32xf32, #tpu.memory_space<vmem>>) attributes {dimension_semantics = [#tpu.dimension_semantics<arbitrary>], iteration_bounds = array<i64: 1>, scalar_prefetch = 0 : i64, scratch_operands = 0 : i64, tpu.core_type = #tpu.core_type<tc>, window_params = [{pipeline_mode = #tpu.pipeline_mode<synchronous>, transform_indices = @transform_0, window_bounds = array<i64: 8, 8, 128>}, {pipeline_mode = #tpu.pipeline_mode<synchronous>, transform_indices = @transform_1, window_bounds = array<i64: 32, 128>}, {pipeline_mode = #tpu.pipeline_mode<synchronous>, transform_indices = @transform_2, window_bounds = array<i64: 8, 32>}]} {
    %c0 = arith.constant 0 : index
    %c0_0 = arith.constant 0 : index
    %0 = vector.load %arg2[%c0, %c0_0] : memref<32x128xf32, #tpu.memory_space<vmem>>, vector<32x128xf32>
    %cst = arith.constant 0.000000e+00 : f32
    %1 = vector.broadcast %cst : f32 to vector<8x32xf32>
    %c0_i32 = arith.constant 0 : i32
    %2 = arith.index_cast %c0_i32 : i32 to index
    %c0_1 = arith.constant 0 : index
    %c0_2 = arith.constant 0 : index
    %3 = vector.load %arg1[%2, %c0_1, %c0_2] : memref<8x8x128xf32, #tpu.memory_space<vmem>>, vector<1x8x128xf32>
    %4 = vector.shape_cast %3 : vector<1x8x128xf32> to vector<8x128xf32>
    %cst_3 = arith.constant dense<0.000000e+00> : vector<8x128xf32>
    %5 = tpu.matmul %1, %0, %cst_3 {dimension_numbers = #tpu.dot_dimension_numbers<[1], [0], [0], [1], [0, 0, 1, 1], [], []>} : vector<8x32xf32>, vector<32x128xf32>, vector<8x128xf32> -> vector<8x128xf32>
    %6 = arith.addf %4, %5 : vector<8x128xf32>
    %7 = arith.negf %6 : vector<8x128xf32>
    %8 = math.exp %7 : vector<8x128xf32>
    %cst_4 = arith.constant 1.000000e+00 : f32
    %9 = vector.broadcast %cst_4 : f32 to vector<8x128xf32>
    %10 = arith.addf %9, %8 : vector<8x128xf32>
    %11 = arith.divf %9, %10 : vector<8x128xf32>
    %12 = math.tanh %6 : vector<8x128xf32>
    %13 = vector.extract_strided_slice %11 {offsets = [0, 0], sizes = [8, 32], strides = [1, 1]} : vector<8x128xf32> to vector<8x32xf32>
    %14 = vector.extract_strided_slice %11 {offsets = [0, 32], sizes = [8, 32], strides = [1, 1]} : vector<8x128xf32> to vector<8x32xf32>
    %15 = vector.extract_strided_slice %12 {offsets = [0, 64], sizes = [8, 32], strides = [1, 1]} : vector<8x128xf32> to vector<8x32xf32>
    %16 = vector.extract_strided_slice %11 {offsets = [0, 96], sizes = [8, 32], strides = [1, 1]} : vector<8x128xf32> to vector<8x32xf32>
    %17 = arith.mulf %14, %1 : vector<8x32xf32>
    %18 = arith.mulf %13, %15 : vector<8x32xf32>
    %19 = arith.addf %17, %18 : vector<8x32xf32>
    %20 = math.tanh %19 : vector<8x32xf32>
    %21 = arith.mulf %16, %20 : vector<8x32xf32>
    %c1_i32 = arith.constant 1 : i32
    %22 = arith.index_cast %c1_i32 : i32 to index
    %c0_5 = arith.constant 0 : index
    %c0_6 = arith.constant 0 : index
    %23 = vector.load %arg1[%22, %c0_5, %c0_6] : memref<8x8x128xf32, #tpu.memory_space<vmem>>, vector<1x8x128xf32>
    %24 = vector.shape_cast %23 : vector<1x8x128xf32> to vector<8x128xf32>
    %cst_7 = arith.constant dense<0.000000e+00> : vector<8x128xf32>
    %25 = tpu.matmul %21, %0, %cst_7 {dimension_numbers = #tpu.dot_dimension_numbers<[1], [0], [0], [1], [0, 0, 1, 1], [], []>} : vector<8x32xf32>, vector<32x128xf32>, vector<8x128xf32> -> vector<8x128xf32>
    %26 = arith.addf %24, %25 : vector<8x128xf32>
    %27 = arith.negf %26 : vector<8x128xf32>
    %28 = math.exp %27 : vector<8x128xf32>
    %cst_8 = arith.constant 1.000000e+00 : f32
    %29 = vector.broadcast %cst_8 : f32 to vector<8x128xf32>
    %30 = arith.addf %29, %28 : vector<8x128xf32>
    %31 = arith.divf %29, %30 : vector<8x128xf32>
    %32 = math.tanh %26 : vector<8x128xf32>
    %33 = vector.extract_strided_slice %31 {offsets = [0, 0], sizes = [8, 32], strides = [1, 1]} : vector<8x128xf32> to vector<8x32xf32>
    %34 = vector.extract_strided_slice %31 {offsets = [0, 32], sizes = [8, 32], strides = [1, 1]} : vector<8x128xf32> to vector<8x32xf32>
    %35 = vector.extract_strided_slice %32 {offsets = [0, 64], sizes = [8, 32], strides = [1, 1]} : vector<8x128xf32> to vector<8x32xf32>
    %36 = vector.extract_strided_slice %31 {offsets = [0, 96], sizes = [8, 32], strides = [1, 1]} : vector<8x128xf32> to vector<8x32xf32>
    %37 = arith.mulf %34, %19 : vector<8x32xf32>
    %38 = arith.mulf %33, %35 : vector<8x32xf32>
    %39 = arith.addf %37, %38 : vector<8x32xf32>
    %40 = math.tanh %39 : vector<8x32xf32>
    %41 = arith.mulf %36, %40 : vector<8x32xf32>
    %c2_i32 = arith.constant 2 : i32
    %42 = arith.index_cast %c2_i32 : i32 to index
    %c0_9 = arith.constant 0 : index
    %c0_10 = arith.constant 0 : index
    %43 = vector.load %arg1[%42, %c0_9, %c0_10] : memref<8x8x128xf32, #tpu.memory_space<vmem>>, vector<1x8x128xf32>
    %44 = vector.shape_cast %43 : vector<1x8x128xf32> to vector<8x128xf32>
    %cst_11 = arith.constant dense<0.000000e+00> : vector<8x128xf32>
    %45 = tpu.matmul %41, %0, %cst_11 {dimension_numbers = #tpu.dot_dimension_numbers<[1], [0], [0], [1], [0, 0, 1, 1], [], []>} : vector<8x32xf32>, vector<32x128xf32>, vector<8x128xf32> -> vector<8x128xf32>
    %46 = arith.addf %44, %45 : vector<8x128xf32>
    %47 = arith.negf %46 : vector<8x128xf32>
    %48 = math.exp %47 : vector<8x128xf32>
    %cst_12 = arith.constant 1.000000e+00 : f32
    %49 = vector.broadcast %cst_12 : f32 to vector<8x128xf32>
    %50 = arith.addf %49, %48 : vector<8x128xf32>
    %51 = arith.divf %49, %50 : vector<8x128xf32>
    %52 = math.tanh %46 : vector<8x128xf32>
    %53 = vector.extract_strided_slice %51 {offsets = [0, 0], sizes = [8, 32], strides = [1, 1]} : vector<8x128xf32> to vector<8x32xf32>
    %54 = vector.extract_strided_slice %51 {offsets = [0, 32], sizes = [8, 32], strides = [1, 1]} : vector<8x128xf32> to vector<8x32xf32>
    %55 = vector.extract_strided_slice %52 {offsets = [0, 64], sizes = [8, 32], strides = [1, 1]} : vector<8x128xf32> to vector<8x32xf32>
    %56 = vector.extract_strided_slice %51 {offsets = [0, 96], sizes = [8, 32], strides = [1, 1]} : vector<8x128xf32> to vector<8x32xf32>
    %57 = arith.mulf %54, %39 : vector<8x32xf32>
    %58 = arith.mulf %53, %55 : vector<8x32xf32>
    %59 = arith.addf %57, %58 : vector<8x32xf32>
    %60 = math.tanh %59 : vector<8x32xf32>
    %61 = arith.mulf %56, %60 : vector<8x32xf32>
    %c3_i32 = arith.constant 3 : i32
    %62 = arith.index_cast %c3_i32 : i32 to index
    %c0_13 = arith.constant 0 : index
    %c0_14 = arith.constant 0 : index
    %63 = vector.load %arg1[%62, %c0_13, %c0_14] : memref<8x8x128xf32, #tpu.memory_space<vmem>>, vector<1x8x128xf32>
    %64 = vector.shape_cast %63 : vector<1x8x128xf32> to vector<8x128xf32>
    %cst_15 = arith.constant dense<0.000000e+00> : vector<8x128xf32>
    %65 = tpu.matmul %61, %0, %cst_15 {dimension_numbers = #tpu.dot_dimension_numbers<[1], [0], [0], [1], [0, 0, 1, 1], [], []>} : vector<8x32xf32>, vector<32x128xf32>, vector<8x128xf32> -> vector<8x128xf32>
    %66 = arith.addf %64, %65 : vector<8x128xf32>
    %67 = arith.negf %66 : vector<8x128xf32>
    %68 = math.exp %67 : vector<8x128xf32>
    %cst_16 = arith.constant 1.000000e+00 : f32
    %69 = vector.broadcast %cst_16 : f32 to vector<8x128xf32>
    %70 = arith.addf %69, %68 : vector<8x128xf32>
    %71 = arith.divf %69, %70 : vector<8x128xf32>
    %72 = math.tanh %66 : vector<8x128xf32>
    %73 = vector.extract_strided_slice %71 {offsets = [0, 0], sizes = [8, 32], strides = [1, 1]} : vector<8x128xf32> to vector<8x32xf32>
    %74 = vector.extract_strided_slice %71 {offsets = [0, 32], sizes = [8, 32], strides = [1, 1]} : vector<8x128xf32> to vector<8x32xf32>
    %75 = vector.extract_strided_slice %72 {offsets = [0, 64], sizes = [8, 32], strides = [1, 1]} : vector<8x128xf32> to vector<8x32xf32>
    %76 = vector.extract_strided_slice %71 {offsets = [0, 96], sizes = [8, 32], strides = [1, 1]} : vector<8x128xf32> to vector<8x32xf32>
    %77 = arith.mulf %74, %59 : vector<8x32xf32>
    %78 = arith.mulf %73, %75 : vector<8x32xf32>
    %79 = arith.addf %77, %78 : vector<8x32xf32>
    %80 = math.tanh %79 : vector<8x32xf32>
    %81 = arith.mulf %76, %80 : vector<8x32xf32>
    %c4_i32 = arith.constant 4 : i32
    %82 = arith.index_cast %c4_i32 : i32 to index
    %c0_17 = arith.constant 0 : index
    %c0_18 = arith.constant 0 : index
    %83 = vector.load %arg1[%82, %c0_17, %c0_18] : memref<8x8x128xf32, #tpu.memory_space<vmem>>, vector<1x8x128xf32>
    %84 = vector.shape_cast %83 : vector<1x8x128xf32> to vector<8x128xf32>
    %cst_19 = arith.constant dense<0.000000e+00> : vector<8x128xf32>
    %85 = tpu.matmul %81, %0, %cst_19 {dimension_numbers = #tpu.dot_dimension_numbers<[1], [0], [0], [1], [0, 0, 1, 1], [], []>} : vector<8x32xf32>, vector<32x128xf32>, vector<8x128xf32> -> vector<8x128xf32>
    %86 = arith.addf %84, %85 : vector<8x128xf32>
    %87 = arith.negf %86 : vector<8x128xf32>
    %88 = math.exp %87 : vector<8x128xf32>
    %cst_20 = arith.constant 1.000000e+00 : f32
    %89 = vector.broadcast %cst_20 : f32 to vector<8x128xf32>
    %90 = arith.addf %89, %88 : vector<8x128xf32>
    %91 = arith.divf %89, %90 : vector<8x128xf32>
    %92 = math.tanh %86 : vector<8x128xf32>
    %93 = vector.extract_strided_slice %91 {offsets = [0, 0], sizes = [8, 32], strides = [1, 1]} : vector<8x128xf32> to vector<8x32xf32>
    %94 = vector.extract_strided_slice %91 {offsets = [0, 32], sizes = [8, 32], strides = [1, 1]} : vector<8x128xf32> to vector<8x32xf32>
    %95 = vector.extract_strided_slice %92 {offsets = [0, 64], sizes = [8, 32], strides = [1, 1]} : vector<8x128xf32> to vector<8x32xf32>
    %96 = vector.extract_strided_slice %91 {offsets = [0, 96], sizes = [8, 32], strides = [1, 1]} : vector<8x128xf32> to vector<8x32xf32>
    %97 = arith.mulf %94, %79 : vector<8x32xf32>
    %98 = arith.mulf %93, %95 : vector<8x32xf32>
    %99 = arith.addf %97, %98 : vector<8x32xf32>
    %100 = math.tanh %99 : vector<8x32xf32>
    %101 = arith.mulf %96, %100 : vector<8x32xf32>
    %c5_i32 = arith.constant 5 : i32
    %102 = arith.index_cast %c5_i32 : i32 to index
    %c0_21 = arith.constant 0 : index
    %c0_22 = arith.constant 0 : index
    %103 = vector.load %arg1[%102, %c0_21, %c0_22] : memref<8x8x128xf32, #tpu.memory_space<vmem>>, vector<1x8x128xf32>
    %104 = vector.shape_cast %103 : vector<1x8x128xf32> to vector<8x128xf32>
    %cst_23 = arith.constant dense<0.000000e+00> : vector<8x128xf32>
    %105 = tpu.matmul %101, %0, %cst_23 {dimension_numbers = #tpu.dot_dimension_numbers<[1], [0], [0], [1], [0, 0, 1, 1], [], []>} : vector<8x32xf32>, vector<32x128xf32>, vector<8x128xf32> -> vector<8x128xf32>
    %106 = arith.addf %104, %105 : vector<8x128xf32>
    %107 = arith.negf %106 : vector<8x128xf32>
    %108 = math.exp %107 : vector<8x128xf32>
    %cst_24 = arith.constant 1.000000e+00 : f32
    %109 = vector.broadcast %cst_24 : f32 to vector<8x128xf32>
    %110 = arith.addf %109, %108 : vector<8x128xf32>
    %111 = arith.divf %109, %110 : vector<8x128xf32>
    %112 = math.tanh %106 : vector<8x128xf32>
    %113 = vector.extract_strided_slice %111 {offsets = [0, 0], sizes = [8, 32], strides = [1, 1]} : vector<8x128xf32> to vector<8x32xf32>
    %114 = vector.extract_strided_slice %111 {offsets = [0, 32], sizes = [8, 32], strides = [1, 1]} : vector<8x128xf32> to vector<8x32xf32>
    %115 = vector.extract_strided_slice %112 {offsets = [0, 64], sizes = [8, 32], strides = [1, 1]} : vector<8x128xf32> to vector<8x32xf32>
    %116 = vector.extract_strided_slice %111 {offsets = [0, 96], sizes = [8, 32], strides = [1, 1]} : vector<8x128xf32> to vector<8x32xf32>
    %117 = arith.mulf %114, %99 : vector<8x32xf32>
    %118 = arith.mulf %113, %115 : vector<8x32xf32>
    %119 = arith.addf %117, %118 : vector<8x32xf32>
    %120 = math.tanh %119 : vector<8x32xf32>
    %121 = arith.mulf %116, %120 : vector<8x32xf32>
    %c6_i32 = arith.constant 6 : i32
    %122 = arith.index_cast %c6_i32 : i32 to index
    %c0_25 = arith.constant 0 : index
    %c0_26 = arith.constant 0 : index
    %123 = vector.load %arg1[%122, %c0_25, %c0_26] : memref<8x8x128xf32, #tpu.memory_space<vmem>>, vector<1x8x128xf32>
    %124 = vector.shape_cast %123 : vector<1x8x128xf32> to vector<8x128xf32>
    %cst_27 = arith.constant dense<0.000000e+00> : vector<8x128xf32>
    %125 = tpu.matmul %121, %0, %cst_27 {dimension_numbers = #tpu.dot_dimension_numbers<[1], [0], [0], [1], [0, 0, 1, 1], [], []>} : vector<8x32xf32>, vector<32x128xf32>, vector<8x128xf32> -> vector<8x128xf32>
    %126 = arith.addf %124, %125 : vector<8x128xf32>
    %127 = arith.negf %126 : vector<8x128xf32>
    %128 = math.exp %127 : vector<8x128xf32>
    %cst_28 = arith.constant 1.000000e+00 : f32
    %129 = vector.broadcast %cst_28 : f32 to vector<8x128xf32>
    %130 = arith.addf %129, %128 : vector<8x128xf32>
    %131 = arith.divf %129, %130 : vector<8x128xf32>
    %132 = math.tanh %126 : vector<8x128xf32>
    %133 = vector.extract_strided_slice %131 {offsets = [0, 0], sizes = [8, 32], strides = [1, 1]} : vector<8x128xf32> to vector<8x32xf32>
    %134 = vector.extract_strided_slice %131 {offsets = [0, 32], sizes = [8, 32], strides = [1, 1]} : vector<8x128xf32> to vector<8x32xf32>
    %135 = vector.extract_strided_slice %132 {offsets = [0, 64], sizes = [8, 32], strides = [1, 1]} : vector<8x128xf32> to vector<8x32xf32>
    %136 = vector.extract_strided_slice %131 {offsets = [0, 96], sizes = [8, 32], strides = [1, 1]} : vector<8x128xf32> to vector<8x32xf32>
    %137 = arith.mulf %134, %119 : vector<8x32xf32>
    %138 = arith.mulf %133, %135 : vector<8x32xf32>
    %139 = arith.addf %137, %138 : vector<8x32xf32>
    %140 = math.tanh %139 : vector<8x32xf32>
    %141 = arith.mulf %136, %140 : vector<8x32xf32>
    %c7_i32 = arith.constant 7 : i32
    %142 = arith.index_cast %c7_i32 : i32 to index
    %c0_29 = arith.constant 0 : index
    %c0_30 = arith.constant 0 : index
    %143 = vector.load %arg1[%142, %c0_29, %c0_30] : memref<8x8x128xf32, #tpu.memory_space<vmem>>, vector<1x8x128xf32>
    %144 = vector.shape_cast %143 : vector<1x8x128xf32> to vector<8x128xf32>
    %cst_31 = arith.constant dense<0.000000e+00> : vector<8x128xf32>
    %145 = tpu.matmul %141, %0, %cst_31 {dimension_numbers = #tpu.dot_dimension_numbers<[1], [0], [0], [1], [0, 0, 1, 1], [], []>} : vector<8x32xf32>, vector<32x128xf32>, vector<8x128xf32> -> vector<8x128xf32>
    %146 = arith.addf %144, %145 : vector<8x128xf32>
    %147 = arith.negf %146 : vector<8x128xf32>
    %148 = math.exp %147 : vector<8x128xf32>
    %cst_32 = arith.constant 1.000000e+00 : f32
    %149 = vector.broadcast %cst_32 : f32 to vector<8x128xf32>
    %150 = arith.addf %149, %148 : vector<8x128xf32>
    %151 = arith.divf %149, %150 : vector<8x128xf32>
    %152 = math.tanh %146 : vector<8x128xf32>
    %153 = vector.extract_strided_slice %151 {offsets = [0, 0], sizes = [8, 32], strides = [1, 1]} : vector<8x128xf32> to vector<8x32xf32>
    %154 = vector.extract_strided_slice %151 {offsets = [0, 32], sizes = [8, 32], strides = [1, 1]} : vector<8x128xf32> to vector<8x32xf32>
    %155 = vector.extract_strided_slice %152 {offsets = [0, 64], sizes = [8, 32], strides = [1, 1]} : vector<8x128xf32> to vector<8x32xf32>
    %156 = vector.extract_strided_slice %151 {offsets = [0, 96], sizes = [8, 32], strides = [1, 1]} : vector<8x128xf32> to vector<8x32xf32>
    %157 = arith.mulf %154, %139 : vector<8x32xf32>
    %158 = arith.mulf %153, %155 : vector<8x32xf32>
    %159 = arith.addf %157, %158 : vector<8x32xf32>
    %160 = math.tanh %159 : vector<8x32xf32>
    %161 = arith.mulf %156, %160 : vector<8x32xf32>
    %c8_i32 = arith.constant 8 : i32
    %c0_33 = arith.constant 0 : index
    %c0_34 = arith.constant 0 : index
    %162 = vector.load %arg3[%c0_33, %c0_34] : memref<8x32xf32, #tpu.memory_space<vmem>>, vector<8x32xf32>
    tpu.vector_store %arg3[%c0_33, %c0_34], %161 {strides = array<i32>} : memref<8x32xf32, #tpu.memory_space<vmem>>, vector<8x32xf32>,
    return
  }
  func.func @transform_0(%arg0: i32) -> (i32, i32, i32) {
    %c0_i32 = arith.constant 0 : i32
    %c0_i32_0 = arith.constant 0 : i32
    %c0_i32_1 = arith.constant 0 : i32
    %c0_i32_2 = arith.constant 0 : i32
    return %c0_i32, %c0_i32_0, %c0_i32_1 : i32, i32, i32
  }
  func.func @transform_1(%arg0: i32) -> (i32, i32) {
    %c0_i32 = arith.constant 0 : i32
    %c0_i32_0 = arith.constant 0 : i32
    %c0_i32_1 = arith.constant 0 : i32
    return %c0_i32, %c0_i32_0 : i32, i32
  }
  func.func @transform_2(%arg0: i32) -> (i32, i32) {
    %c0_i32 = arith.constant 0 : i32
    %c0_i32_0 = arith.constant 0 : i32
    %c0_i32_1 = arith.constant 0 : i32
    return %c0_i32, %c0_i32_0 : i32, i32
  }
}

</mosaic_0001>

<llo_original>
// kernel: tpu_custom_call.1
$region0: #{tpu_custom_call.1}
  #allocation0 [shape = 'u32[]', space=smem, size = 0x4, offset = 0x4, fixed_abs, tag = 'smem constant byte address 0x4 - core index']
  #allocation1 [shape = 'u32[144,128]{1,0:T(1,128)}', space=vmem, size = 0x12000, scoped, tag = 'internal scratch']
  %s0 = inlined_call_operand.hbm [shape: f32[8,8,128], index: 0, kind: input, shape index: {}]
  %s1 = inlined_call_operand.hbm [shape: f32[32,128], index: 1, kind: input, shape index: {}]
  %s2 = inlined_call_operand.hbm [shape: f32[8,32], index: 2, kind: output, shape index: {}]
  %s3 = sld [smem:[#allocation0]]
  $region26: #{tpu_custom_call.1} parent=0
    _
  %s5 = ssub.s32 1, %s3
  %s6 = scalar_select 0, %s5, %s3
  $region1: #{tpu_custom_call.1} parent=0
    #allocation2 [shape = 'u8[32768]{0}', space=vmem, size = 0x8000, scoped, tag = 'input window, operand 0, single buffered']
    #allocation3 [shape = 's32[1]{0}', space=sflag, size = 0x4, scoped, tag = 'scoped memory for tpu_custom_call.1']
    #allocation4 [shape = 's32[1]{0}', space=sflag, size = 0x4, scoped, tag = 'scoped memory for tpu_custom_call.1']
    #allocation5 [shape = 'u8[16384]{0}', space=vmem, size = 0x4000, scoped, tag = 'input window, operand 1, single buffered']
    #allocation6 [shape = 's32[1]{0}', space=sflag, size = 0x4, scoped, tag = 'scoped memory for tpu_custom_call.1']
    #allocation7 [shape = 'u8[4096]{0}', space=vmem, size = 0x1000, scoped, tag = 'output window, operand 0, single buffered']
    %7 = vsyncpa [#allocation3], 0
    %8 = vsyncpa [#allocation6], 0
    %9 = vsyncpa [#allocation4], 0
    // Predicated region
    $region2: #{tpu_custom_call.1} parent=1 // pred_check
      _
    $region3: #{tpu_custom_call.1} parent=1 // pred_check_branch
      %11 = sbr.rel (0) target = $region5
    $region4: #{tpu_custom_call.1} parent=1 // pred_region
      %s13 = ssub.s32 1024, 1024
      %14 = vsyncadd [#allocation3], %s13
      %s15 = sshll.u32 [#allocation2], 4
      %s16 = int_to_ptr.vmem [resolvable:$true] %s15
      %21 = dma.hbm_to_vmem [thread:$0]  %s0, 1024, %s16, [#allocation3], 128, 128, 8
    $region5: #{tpu_custom_call.1} parent=1 // pred_fallthru
      _
    // Predicated region
    $region6: #{tpu_custom_call.1} parent=1 // pred_check
      _
    $region7: #{tpu_custom_call.1} parent=1 // pred_check_branch
      %23 = sbr.rel (0) target = $region9
    $region8: #{tpu_custom_call.1} parent=1 // pred_region
      %s25 = ssub.s32 512, 512
      %26 = vsyncadd [#allocation6], %s25
      %s27 = sshll.u32 [#allocation5], 4
      %s28 = int_to_ptr.vmem [resolvable:$true] %s27
      %33 = dma.hbm_to_vmem [thread:$0]  %s1, 512, %s28, [#allocation6], 128, 128, 8
    $region9: #{tpu_custom_call.1} parent=1 // pred_fallthru
      _
    // Predicated region
    $region10: #{tpu_custom_call.1} parent=1 // pred_check
      _
    $region11: #{tpu_custom_call.1} parent=1 // pred_check_branch
      %35 = sbr.rel (0) target = $region13
    $region12: #{tpu_custom_call.1} parent=1 // pred_region
      %36 = dma.done [#allocation3], 1024
    $region13: #{tpu_custom_call.1} parent=1 // pred_fallthru
      _
    // Predicated region
    $region14: #{tpu_custom_call.1} parent=1 // pred_check
      _
    $region15: #{tpu_custom_call.1} parent=1 // pred_check_branch
      %38 = sbr.rel (0) target = $region17
    $region16: #{tpu_custom_call.1} parent=1 // pred_region
      %39 = dma.done [#allocation6], 512
    $region17: #{tpu_custom_call.1} parent=1 // pred_fallthru
      _
    %v40 = vld [vmem:[#allocation5] sm:$0xff]
    %v41 = vld [vmem:[#allocation5 + $0x8] sm:$0xff]
    %v42 = vld [vmem:[#allocation5 + $0x10] sm:$0xff]
    %v43 = vld [vmem:[#allocation5 + $0x18] sm:$0xff]
    %v44 = vld [vmem:[#allocation2] sm:$0xff]
    %vm45 = vcmask 261120
    %v47 = vsel %vm45, 0.0, 0
    %49 = vmatprep.subr.mxu0 0.0
    %50 = vmatpush1.msra.mxu0 %v40
    %51 = vmatprep.subr.mxu0 0.0
    %52 = vmatpush1.msra.mxu0 %v41
    %53 = vmatprep.subr.mxu0 0.0
    %54 = vmatpush1.msra.mxu0 %v42
    %55 = vmatprep.subr.mxu0 0.0
    %56 = vmatpush1.msra.mxu0 %v43
    %57 = vmatprep.subr.mxu0 0.0
    %58 = vmatpush1.msra.mxu0 0.0
    %59 = vmatprep.subr.mxu0 0.0
    %60 = vmatpush1.msra.mxu0 0.0
    %61 = vmatprep.subr.mxu0 0.0
    %62 = vmatpush1.msra.mxu0 0.0
    %63 = vmatprep.subr.mxu0 0.0
    %64 = vmatpush1.msra.mxu0 0.0
    %65 = vmatprep.subr.mxu0 0.0
    %66 = vmatpush1.msra.mxu0 0.0
    %67 = vmatprep.subr.mxu0 0.0
    %68 = vmatpush1.msra.mxu0 0.0
    %69 = vmatprep.subr.mxu0 0.0
    %70 = vmatpush1.msra.mxu0 0.0
    %71 = vmatprep.subr.mxu0 0.0
    %72 = vmatpush1.msra.mxu0 0.0
    %73 = vmatprep.subr.mxu0 0.0
    %74 = vmatpush1.msra.mxu0 0.0
    %75 = vmatprep.subr.mxu0 0.0
    %76 = vmatpush1.msra.mxu0 0.0
    %77 = vmatprep.subr.mxu0 0.0
    %78 = vmatpush1.msra.mxu0 0.0
    %79 = vmatprep.subr.mxu0 0.0
    %80 = vmatpush1.msra.mxu0 0.0
    %81 = vmatprep.subr.mxu0 0.0
    %82 = vmatpush1.msra.mxu0 0.0
    %83 = vmatprep.subr.mxu0 0.0
    %84 = vmatpush1.msra.mxu0 0.0
    %85 = vmatprep.subr.mxu0 0.0
    %86 = vmatpush1.msra.mxu0 0.0
    %87 = vmatprep.subr.mxu0 0.0
    %88 = vmatpush1.msra.mxu0 0.0
    %89 = vmatprep.subr.mxu0 0.0
    %90 = vmatpush1.msra.mxu0 0.0
    %91 = vmatprep.subr.mxu0 0.0
    %92 = vmatpush1.msra.mxu0 0.0
    %93 = vmatprep.subr.mxu0 0.0
    %94 = vmatpush1.msra.mxu0 0.0
    %95 = vmatprep.subr.mxu0 0.0
    %96 = vmatpush1.msra.mxu0 0.0
    %97 = vmatprep.subr.mxu0 0.0
    %98 = vmatpush1.msra.mxu0 0.0
    %99 = vmatprep.subr.mxu0 0.0
    %100 = vmatpush1.msra.mxu0 0.0
    %101 = vmatprep.subr.mxu0 0.0
    %102 = vmatpush1.msra.mxu0 0.0
    %103 = vmatprep.subr.mxu0 0.0
    %104 = vmatpush1.msra.mxu0 0.0
    %105 = vmatprep.subr.mxu0 0.0
    %106 = vmatpush1.msra.mxu0 0.0
    %107 = vmatprep.subr.mxu0 0.0
    %108 = vmatpush1.msra.mxu0 0.0
    %109 = vmatprep.subr.mxu0 0.0
    %110 = vmatpush1.msra.mxu0 0.0
    %111 = vmatprep.subr.mxu0 0.0
    %112 = vmatpush1.msra.mxu0 0.0
    %113 = vmatprep.mubr.f32.mxu0 0.0
    %114 = vmatmul.mubr.f32.gmra.mrb[0].mxu0 %v47
    %v115 = vpop.f32.mrb[0].mxu0
    %v116 = vadd.f32 0.0, %v115
    %v117 = vpop.f32.mrb[0].mxu0
    %118 = vdwg.mxu0
    %v119 = vadd.f32 %v44, %v116
    %v120 = vxor.u32 %v119, 2147483648
    %v121 = vmul.f32 %v120, 1.442695
    %v122 = vpow.pop %v121
    %v123 = vadd.f32 %v122, 1.0
    %v124 = vrcp.pop %v123
    %v125 = vmul.f32 1.0, %v124
    %v126 = vtanh.pop %v119
    %v127 = vmul.f32 %v125, 0.0
    %129 = vrot.lane.b32.xlu0 %v126, 64
    %v130 = vpop.permute.xlu0 %129
    %v132 = vmul.f32 %v125, %v130
    %134 = vrot.lane.b32.xlu0 %v132, 32
    %v135 = vpop.permute.xlu0 %134
    %v137 = vadd.f32 %v127, %v135
    %v138 = vtanh.pop %v137
    %140 = vrot.lane.b32.xlu0 %v138, 64
    %v141 = vpop.permute.xlu0 %140
    %v143 = vmul.f32 %v125, %v141
    %s144 = scalar_lea.vmem [#allocation2], 8
    %v145 = vld [vmem:[%s144] sm:$0xff]
    %147 = vrot.lane.b32.xlu0 %v143, 32
    %v148 = vpop.permute.xlu0 %147
    %v149 = vsel %vm45, %v148, 0
    %151 = vmatprep.subr.mxu0 0.0
    %152 = vmatpush1.msra.mxu0 %v40
    %153 = vmatprep.subr.mxu0 0.0
    %154 = vmatpush1.msra.mxu0 %v41
    %155 = vmatprep.subr.mxu0 0.0
    %156 = vmatpush1.msra.mxu0 %v42
    %157 = vmatprep.subr.mxu0 0.0
    %158 = vmatpush1.msra.mxu0 %v43
    %159 = vmatprep.subr.mxu0 0.0
    %160 = vmatpush1.msra.mxu0 0.0
    %161 = vmatprep.subr.mxu0 0.0
    %162 = vmatpush1.msra.mxu0 0.0
    %163 = vmatprep.subr.mxu0 0.0
    %164 = vmatpush1.msra.mxu0 0.0
    %165 = vmatprep.subr.mxu0 0.0
    %166 = vmatpush1.msra.mxu0 0.0
    %167 = vmatprep.subr.mxu0 0.0
    %168 = vmatpush1.msra.mxu0 0.0
    %169 = vmatprep.subr.mxu0 0.0
    %170 = vmatpush1.msra.mxu0 0.0
    %171 = vmatprep.subr.mxu0 0.0
    %172 = vmatpush1.msra.mxu0 0.0
    %173 = vmatprep.subr.mxu0 0.0
    %174 = vmatpush1.msra.mxu0 0.0
    %175 = vmatprep.subr.mxu0 0.0
    %176 = vmatpush1.msra.mxu0 0.0
    %177 = vmatprep.subr.mxu0 0.0
    %178 = vmatpush1.msra.mxu0 0.0
    %179 = vmatprep.subr.mxu0 0.0
    %180 = vmatpush1.msra.mxu0 0.0
    %181 = vmatprep.subr.mxu0 0.0
    %182 = vmatpush1.msra.mxu0 0.0
    %183 = vmatprep.subr.mxu0 0.0
    %184 = vmatpush1.msra.mxu0 0.0
    %185 = vmatprep.subr.mxu0 0.0
    %186 = vmatpush1.msra.mxu0 0.0
    %187 = vmatprep.subr.mxu0 0.0
    %188 = vmatpush1.msra.mxu0 0.0
    %189 = vmatprep.subr.mxu0 0.0
    %190 = vmatpush1.msra.mxu0 0.0
    %191 = vmatprep.subr.mxu0 0.0
    %192 = vmatpush1.msra.mxu0 0.0
    %193 = vmatprep.subr.mxu0 0.0
    %194 = vmatpush1.msra.mxu0 0.0
    %195 = vmatprep.subr.mxu0 0.0
    %196 = vmatpush1.msra.mxu0 0.0
    %197 = vmatprep.subr.mxu0 0.0
    %198 = vmatpush1.msra.mxu0 0.0
    %199 = vmatprep.subr.mxu0 0.0
    %200 = vmatpush1.msra.mxu0 0.0
    %201 = vmatprep.subr.mxu0 0.0
    %202 = vmatpush1.msra.mxu0 0.0
    %203 = vmatprep.subr.mxu0 0.0
    %204 = vmatpush1.msra.mxu0 0.0
    %205 = vmatprep.subr.mxu0 0.0
    %206 = vmatpush1.msra.mxu0 0.0
    %207 = vmatprep.subr.mxu0 0.0
    %208 = vmatpush1.msra.mxu0 0.0
    %209 = vmatprep.subr.mxu0 0.0
    %210 = vmatpush1.msra.mxu0 0.0
    %211 = vmatprep.subr.mxu0 0.0
    %212 = vmatpush1.msra.mxu0 0.0
    %213 = vmatprep.subr.mxu0 0.0
    %214 = vmatpush1.msra.mxu0 0.0
    %215 = vmatprep.mubr.f32.mxu0 0.0
    %216 = vmatmul.mubr.f32.gmra.mrb[0].mxu0 %v149
    %v217 = vpop.f32.mrb[0].mxu0
    %v218 = vadd.f32 0.0, %v217
    %v219 = vpop.f32.mrb[0].mxu0
    %220 = vdwg.mxu0
    %v221 = vadd.f32 %v145, %v218
    %v222 = vxor.u32 %v221, 2147483648
    %v223 = vmul.f32 %v222, 1.442695
    %v224 = vpow.pop %v223
    %v225 = vadd.f32 %v224, 1.0
    %v226 = vrcp.pop %v225
    %v227 = vmul.f32 1.0, %v226
    %v228 = vtanh.pop %v221
    %v229 = vmul.f32 %v227, %v137
    %231 = vrot.lane.b32.xlu0 %v228, 64
    %v232 = vpop.permute.xlu0 %231
    %v234 = vmul.f32 %v227, %v232
    %236 = vrot.lane.b32.xlu0 %v234, 32
    %v237 = vpop.permute.xlu0 %236
    %v239 = vadd.f32 %v229, %v237
    %v240 = vtanh.pop %v239
    %242 = vrot.lane.b32.xlu0 %v240, 64
    %v243 = vpop.permute.xlu0 %242
    %v245 = vmul.f32 %v227, %v243
    %s246 = scalar_lea.vmem [#allocation2], 16
    %v247 = vld [vmem:[%s246] sm:$0xff]
    %249 = vrot.lane.b32.xlu0 %v245, 32
    %v250 = vpop.permute.xlu0 %249
    %v251 = vsel %vm45, %v250, 0
    %253 = vmatprep.subr.mxu0 0.0
    %254 = vmatpush1.msra.mxu0 %v40
    %255 = vmatprep.subr.mxu0 0.0
    %256 = vmatpush1.msra.mxu0 %v41
    %257 = vmatprep.subr.mxu0 0.0
    %258 = vmatpush1.msra.mxu0 %v42
    %259 = vmatprep.subr.mxu0 0.0
    %260 = vmatpush1.msra.mxu0 %v43
    %261 = vmatprep.subr.mxu0 0.0
    %262 = vmatpush1.msra.mxu0 0.0
    %263 = vmatprep.subr.mxu0 0.0
    %264 = vmatpush1.msra.mxu0 0.0
    %265 = vmatprep.subr.mxu0 0.0
    %266 = vmatpush1.msra.mxu0 0.0
    %267 = vmatprep.subr.mxu0 0.0
    %268 = vmatpush1.msra.mxu0 0.0
    %269 = vmatprep.subr.mxu0 0.0
    %270 = vmatpush1.msra.mxu0 0.0
    %271 = vmatprep.subr.mxu0 0.0
    %272 = vmatpush1.msra.mxu0 0.0
    %273 = vmatprep.subr.mxu0 0.0
    %274 = vmatpush1.msra.mxu0 0.0
    %275 = vmatprep.subr.mxu0 0.0
    %276 = vmatpush1.msra.mxu0 0.0
    %277 = vmatprep.subr.mxu0 0.0
    %278 = vmatpush1.msra.mxu0 0.0
    %279 = vmatprep.subr.mxu0 0.0
    %280 = vmatpush1.msra.mxu0 0.0
    %281 = vmatprep.subr.mxu0 0.0
    %282 = vmatpush1.msra.mxu0 0.0
    %283 = vmatprep.subr.mxu0 0.0
    %284 = vmatpush1.msra.mxu0 0.0
    %285 = vmatprep.subr.mxu0 0.0
    %286 = vmatpush1.msra.mxu0 0.0
    %287 = vmatprep.subr.mxu0 0.0
    %288 = vmatpush1.msra.mxu0 0.0
    %289 = vmatprep.subr.mxu0 0.0
    %290 = vmatpush1.msra.mxu0 0.0
    %291 = vmatprep.subr.mxu0 0.0
    %292 = vmatpush1.msra.mxu0 0.0
    %293 = vmatprep.subr.mxu0 0.0
    %294 = vmatpush1.msra.mxu0 0.0
    %295 = vmatprep.subr.mxu0 0.0
    %296 = vmatpush1.msra.mxu0 0.0
    %297 = vmatprep.subr.mxu0 0.0
    %298 = vmatpush1.msra.mxu0 0.0
    %299 = vmatprep.subr.mxu0 0.0
    %300 = vmatpush1.msra.mxu0 0.0
    %301 = vmatprep.subr.mxu0 0.0
    %302 = vmatpush1.msra.mxu0 0.0
    %303 = vmatprep.subr.mxu0 0.0
    %304 = vmatpush1.msra.mxu0 0.0
    %305 = vmatprep.subr.mxu0 0.0
    %306 = vmatpush1.msra.mxu0 0.0
    %307 = vmatprep.subr.mxu0 0.0
    %308 = vmatpush1.msra.mxu0 0.0
    %309 = vmatprep.subr.mxu0 0.0
    %310 = vmatpush1.msra.mxu0 0.0
    %311 = vmatprep.subr.mxu0 0.0
    %312 = vmatpush1.msra.mxu0 0.0
    %313 = vmatprep.subr.mxu0 0.0
    %314 = vmatpush1.msra.mxu0 0.0
    %315 = vmatprep.subr.mxu0 0.0
    %316 = vmatpush1.msra.mxu0 0.0
    %317 = vmatprep.mubr.f32.mxu0 0.0
    %318 = vmatmul.mubr.f32.gmra.mrb[0].mxu0 %v251
    %v319 = vpop.f32.mrb[0].mxu0
    %v320 = vadd.f32 0.0, %v319
    %v321 = vpop.f32.mrb[0].mxu0
    %322 = vdwg.mxu0
    %v323 = vadd.f32 %v247, %v320
    %v324 = vxor.u32 %v323, 2147483648
    %v325 = vmul.f32 %v324, 1.442695
    %v326 = vpow.pop %v325
    %v327 = vadd.f32 %v326, 1.0
    %v328 = vrcp.pop %v327
    %v329 = vmul.f32 1.0, %v328
    %v330 = vtanh.pop %v323
    %v331 = vmul.f32 %v329, %v239
    %333 = vrot.lane.b32.xlu0 %v330, 64
    %v334 = vpop.permute.xlu0 %333
    %v336 = vmul.f32 %v329, %v334
    %338 = vrot.lane.b32.xlu0 %v336, 32
    %v339 = vpop.permute.xlu0 %338
    %v341 = vadd.f32 %v331, %v339
    %v342 = vtanh.pop %v341
    %344 = vrot.lane.b32.xlu0 %v342, 64
    %v345 = vpop.permute.xlu0 %344
    %v347 = vmul.f32 %v329, %v345
    %s348 = scalar_lea.vmem [#allocation2], 24
    %v349 = vld [vmem:[%s348] sm:$0xff]
    %351 = vrot.lane.b32.xlu0 %v347, 32
    %v352 = vpop.permute.xlu0 %351
    %v353 = vsel %vm45, %v352, 0
    %355 = vmatprep.subr.mxu0 0.0
    %356 = vmatpush1.msra.mxu0 %v40
    %357 = vmatprep.subr.mxu0 0.0
    %358 = vmatpush1.msra.mxu0 %v41
    %359 = vmatprep.subr.mxu0 0.0
    %360 = vmatpush1.msra.mxu0 %v42
    %361 = vmatprep.subr.mxu0 0.0
    %362 = vmatpush1.msra.mxu0 %v43
    %363 = vmatprep.subr.mxu0 0.0
    %364 = vmatpush1.msra.mxu0 0.0
    %365 = vmatprep.subr.mxu0 0.0
    %366 = vmatpush1.msra.mxu0 0.0
    %367 = vmatprep.subr.mxu0 0.0
    %368 = vmatpush1.msra.mxu0 0.0
    %369 = vmatprep.subr.mxu0 0.0
    %370 = vmatpush1.msra.mxu0 0.0
    %371 = vmatprep.subr.mxu0 0.0
    %372 = vmatpush1.msra.mxu0 0.0
    %373 = vmatprep.subr.mxu0 0.0
    %374 = vmatpush1.msra.mxu0 0.0
    %375 = vmatprep.subr.mxu0 0.0
    %376 = vmatpush1.msra.mxu0 0.0
    %377 = vmatprep.subr.mxu0 0.0
    %378 = vmatpush1.msra.mxu0 0.0
    %379 = vmatprep.subr.mxu0 0.0
    %380 = vmatpush1.msra.mxu0 0.0
    %381 = vmatprep.subr.mxu0 0.0
    %382 = vmatpush1.msra.mxu0 0.0
    %383 = vmatprep.subr.mxu0 0.0
    %384 = vmatpush1.msra.mxu0 0.0
    %385 = vmatprep.subr.mxu0 0.0
    %386 = vmatpush1.msra.mxu0 0.0
    %387 = vmatprep.subr.mxu0 0.0
    %388 = vmatpush1.msra.mxu0 0.0
    %389 = vmatprep.subr.mxu0 0.0
    %390 = vmatpush1.msra.mxu0 0.0
    %391 = vmatprep.subr.mxu0 0.0
    %392 = vmatpush1.msra.mxu0 0.0
    %393 = vmatprep.subr.mxu0 0.0
    %394 = vmatpush1.msra.mxu0 0.0
    %395 = vmatprep.subr.mxu0 0.0
    %396 = vmatpush1.msra.mxu0 0.0
    %397 = vmatprep.subr.mxu0 0.0
    %398 = vmatpush1.msra.mxu0 0.0
    %399 = vmatprep.subr.mxu0 0.0
    %400 = vmatpush1.msra.mxu0 0.0
    %401 = vmatprep.subr.mxu0 0.0
    %402 = vmatpush1.msra.mxu0 0.0
    %403 = vmatprep.subr.mxu0 0.0
    %404 = vmatpush1.msra.mxu0 0.0
    %405 = vmatprep.subr.mxu0 0.0
    %406 = vmatpush1.msra.mxu0 0.0
    %407 = vmatprep.subr.mxu0 0.0
    %408 = vmatpush1.msra.mxu0 0.0
    %409 = vmatprep.subr.mxu0 0.0
    %410 = vmatpush1.msra.mxu0 0.0
    %411 = vmatprep.subr.mxu0 0.0
    %412 = vmatpush1.msra.mxu0 0.0
    %413 = vmatprep.subr.mxu0 0.0
    %414 = vmatpush1.msra.mxu0 0.0
    %415 = vmatprep.subr.mxu0 0.0
    %416 = vmatpush1.msra.mxu0 0.0
    %417 = vmatprep.subr.mxu0 0.0
    %418 = vmatpush1.msra.mxu0 0.0
    %419 = vmatprep.mubr.f32.mxu0 0.0
    %420 = vmatmul.mubr.f32.gmra.mrb[0].mxu0 %v353
    %v421 = vpop.f32.mrb[0].mxu0
    %v422 = vadd.f32 0.0, %v421
    %v423 = vpop.f32.mrb[0].mxu0
    %424 = vdwg.mxu0
    %v425 = vadd.f32 %v349, %v422
    %v426 = vxor.u32 %v425, 2147483648
    %v427 = vmul.f32 %v426, 1.442695
    %v428 = vpow.pop %v427
    %v429 = vadd.f32 %v428, 1.0
    %v430 = vrcp.pop %v429
    %v431 = vmul.f32 1.0, %v430
    %v432 = vtanh.pop %v425
    %v433 = vmul.f32 %v431, %v341
    %435 = vrot.lane.b32.xlu0 %v432, 64
    %v436 = vpop.permute.xlu0 %435
    %v438 = vmul.f32 %v431, %v436
    %440 = vrot.lane.b32.xlu0 %v438, 32
    %v441 = vpop.permute.xlu0 %440
    %v443 = vadd.f32 %v433, %v441
    %v444 = vtanh.pop %v443
    %446 = vrot.lane.b32.xlu0 %v444, 64
    %v447 = vpop.permute.xlu0 %446
    %v449 = vmul.f32 %v431, %v447
    %s450 = scalar_lea.vmem [#allocation2], 32
    %v451 = vld [vmem:[%s450] sm:$0xff]
    %453 = vrot.lane.b32.xlu0 %v449, 32
    %v454 = vpop.permute.xlu0 %453
    %v455 = vsel %vm45, %v454, 0
    %457 = vmatprep.subr.mxu0 0.0
    %458 = vmatpush1.msra.mxu0 %v40
    %459 = vmatprep.subr.mxu0 0.0
    %460 = vmatpush1.msra.mxu0 %v41
    %461 = vmatprep.subr.mxu0 0.0
    %462 = vmatpush1.msra.mxu0 %v42
    %463 = vmatprep.subr.mxu0 0.0
    %464 = vmatpush1.msra.mxu0 %v43
    %465 = vmatprep.subr.mxu0 0.0
    %466 = vmatpush1.msra.mxu0 0.0
    %467 = vmatprep.subr.mxu0 0.0
    %468 = vmatpush1.msra.mxu0 0.0
    %469 = vmatprep.subr.mxu0 0.0
    %470 = vmatpush1.msra.mxu0 0.0
    %471 = vmatprep.subr.mxu0 0.0
    %472 = vmatpush1.msra.mxu0 0.0
    %473 = vmatprep.subr.mxu0 0.0
    %474 = vmatpush1.msra.mxu0 0.0
    %475 = vmatprep.subr.mxu0 0.0
    %476 = vmatpush1.msra.mxu0 0.0
    %477 = vmatprep.subr.mxu0 0.0
    %478 = vmatpush1.msra.mxu0 0.0
    %479 = vmatprep.subr.mxu0 0.0
    %480 = vmatpush1.msra.mxu0 0.0
    %481 = vmatprep.subr.mxu0 0.0
    %482 = vmatpush1.msra.mxu0 0.0
    %483 = vmatprep.subr.mxu0 0.0
    %484 = vmatpush1.msra.mxu0 0.0
    %485 = vmatprep.subr.mxu0 0.0
    %486 = vmatpush1.msra.mxu0 0.0
    %487 = vmatprep.subr.mxu0 0.0
    %488 = vmatpush1.msra.mxu0 0.0
    %489 = vmatprep.subr.mxu0 0.0
    %490 = vmatpush1.msra.mxu0 0.0
    %491 = vmatprep.subr.mxu0 0.0
    %492 = vmatpush1.msra.mxu0 0.0
    %493 = vmatprep.subr.mxu0 0.0
    %494 = vmatpush1.msra.mxu0 0.0
    %495 = vmatprep.subr.mxu0 0.0
    %496 = vmatpush1.msra.mxu0 0.0
    %497 = vmatprep.subr.mxu0 0.0
    %498 = vmatpush1.msra.mxu0 0.0
    %499 = vmatprep.subr.mxu0 0.0
    %500 = vmatpush1.msra.mxu0 0.0
    %501 = vmatprep.subr.mxu0 0.0
    %502 = vmatpush1.msra.mxu0 0.0
    %503 = vmatprep.subr.mxu0 0.0
    %504 = vmatpush1.msra.mxu0 0.0
    %505 = vmatprep.subr.mxu0 0.0
    %506 = vmatpush1.msra.mxu0 0.0
    %507 = vmatprep.subr.mxu0 0.0
    %508 = vmatpush1.msra.mxu0 0.0
    %509 = vmatprep.subr.mxu0 0.0
    %510 = vmatpush1.msra.mxu0 0.0
    %511 = vmatprep.subr.mxu0 0.0
    %512 = vmatpush1.msra.mxu0 0.0
    %513 = vmatprep.subr.mxu0 0.0
    %514 = vmatpush1.msra.mxu0 0.0
    %515 = vmatprep.subr.mxu0 0.0
    %516 = vmatpush1.msra.mxu0 0.0
    %517 = vmatprep.subr.mxu0 0.0
    %518 = vmatpush1.msra.mxu0 0.0
    %519 = vmatprep.subr.mxu0 0.0
    %520 = vmatpush1.msra.mxu0 0.0
    %521 = vmatprep.mubr.f32.mxu0 0.0
    %522 = vmatmul.mubr.f32.gmra.mrb[0].mxu0 %v455
    %v523 = vpop.f32.mrb[0].mxu0
    %v524 = vadd.f32 0.0, %v523
    %v525 = vpop.f32.mrb[0].mxu0
    %526 = vdwg.mxu0
    %v527 = vadd.f32 %v451, %v524
    %v528 = vxor.u32 %v527, 2147483648
    %v529 = vmul.f32 %v528, 1.442695
    %v530 = vpow.pop %v529
    %v531 = vadd.f32 %v530, 1.0
    %v532 = vrcp.pop %v531
    %v533 = vmul.f32 1.0, %v532
    %v534 = vtanh.pop %v527
    %v535 = vmul.f32 %v533, %v443
    %537 = vrot.lane.b32.xlu0 %v534, 64
    %v538 = vpop.permute.xlu0 %537
    %v540 = vmul.f32 %v533, %v538
    %542 = vrot.lane.b32.xlu0 %v540, 32
    %v543 = vpop.permute.xlu0 %542
    %v545 = vadd.f32 %v535, %v543
    %v546 = vtanh.pop %v545
    %548 = vrot.lane.b32.xlu0 %v546, 64
    %v549 = vpop.permute.xlu0 %548
    %v551 = vmul.f32 %v533, %v549
    %s552 = scalar_lea.vmem [#allocation2], 40
    %v553 = vld [vmem:[%s552] sm:$0xff]
    %555 = vrot.lane.b32.xlu0 %v551, 32
    %v556 = vpop.permute.xlu0 %555
    %v557 = vsel %vm45, %v556, 0
    %559 = vmatprep.subr.mxu0 0.0
    %560 = vmatpush1.msra.mxu0 %v40
    %561 = vmatprep.subr.mxu0 0.0
    %562 = vmatpush1.msra.mxu0 %v41
    %563 = vmatprep.subr.mxu0 0.0
    %564 = vmatpush1.msra.mxu0 %v42
    %565 = vmatprep.subr.mxu0 0.0
    %566 = vmatpush1.msra.mxu0 %v43
    %567 = vmatprep.subr.mxu0 0.0
    %568 = vmatpush1.msra.mxu0 0.0
    %569 = vmatprep.subr.mxu0 0.0
    %570 = vmatpush1.msra.mxu0 0.0
    %571 = vmatprep.subr.mxu0 0.0
    %572 = vmatpush1.msra.mxu0 0.0
    %573 = vmatprep.subr.mxu0 0.0
    %574 = vmatpush1.msra.mxu0 0.0
    %575 = vmatprep.subr.mxu0 0.0
    %576 = vmatpush1.msra.mxu0 0.0
    %577 = vmatprep.subr.mxu0 0.0
    %578 = vmatpush1.msra.mxu0 0.0
    %579 = vmatprep.subr.mxu0 0.0
    %580 = vmatpush1.msra.mxu0 0.0
    %581 = vmatprep.subr.mxu0 0.0
    %582 = vmatpush1.msra.mxu0 0.0
    %583 = vmatprep.subr.mxu0 0.0
    %584 = vmatpush1.msra.mxu0 0.0
    %585 = vmatprep.subr.mxu0 0.0
    %586 = vmatpush1.msra.mxu0 0.0
    %587 = vmatprep.subr.mxu0 0.0
    %588 = vmatpush1.msra.mxu0 0.0
    %589 = vmatprep.subr.mxu0 0.0
    %590 = vmatpush1.msra.mxu0 0.0
    %591 = vmatprep.subr.mxu0 0.0
    %592 = vmatpush1.msra.mxu0 0.0
    %593 = vmatprep.subr.mxu0 0.0
    %594 = vmatpush1.msra.mxu0 0.0
    %595 = vmatprep.subr.mxu0 0.0
    %596 = vmatpush1.msra.mxu0 0.0
    %597 = vmatprep.subr.mxu0 0.0
    %598 = vmatpush1.msra.mxu0 0.0
    %599 = vmatprep.subr.mxu0 0.0
    %600 = vmatpush1.msra.mxu0 0.0
    %601 = vmatprep.subr.mxu0 0.0
    %602 = vmatpush1.msra.mxu0 0.0
    %603 = vmatprep.subr.mxu0 0.0
    %604 = vmatpush1.msra.mxu0 0.0
    %605 = vmatprep.subr.mxu0 0.0
    %606 = vmatpush1.msra.mxu0 0.0
    %607 = vmatprep.subr.mxu0 0.0
    %608 = vmatpush1.msra.mxu0 0.0
    %609 = vmatprep.subr.mxu0 0.0
    %610 = vmatpush1.msra.mxu0 0.0
    %611 = vmatprep.subr.mxu0 0.0
    %612 = vmatpush1.msra.mxu0 0.0
    %613 = vmatprep.subr.mxu0 0.0
    %614 = vmatpush1.msra.mxu0 0.0
    %615 = vmatprep.subr.mxu0 0.0
    %616 = vmatpush1.msra.mxu0 0.0
    %617 = vmatprep.subr.mxu0 0.0
    %618 = vmatpush1.msra.mxu0 0.0
    %619 = vmatprep.subr.mxu0 0.0
    %620 = vmatpush1.msra.mxu0 0.0
    %621 = vmatprep.subr.mxu0 0.0
    %622 = vmatpush1.msra.mxu0 0.0
    %623 = vmatprep.mubr.f32.mxu0 0.0
    %624 = vmatmul.mubr.f32.gmra.mrb[0].mxu0 %v557
    %v625 = vpop.f32.mrb[0].mxu0
    %v626 = vadd.f32 0.0, %v625
    %v627 = vpop.f32.mrb[0].mxu0
    %628 = vdwg.mxu0
    %v629 = vadd.f32 %v553, %v626
    %v630 = vxor.u32 %v629, 2147483648
    %v631 = vmul.f32 %v630, 1.442695
    %v632 = vpow.pop %v631
    %v633 = vadd.f32 %v632, 1.0
    %v634 = vrcp.pop %v633
    %v635 = vmul.f32 1.0, %v634
    %v636 = vtanh.pop %v629
    %v637 = vmul.f32 %v635, %v545
    %639 = vrot.lane.b32.xlu0 %v636, 64
    %v640 = vpop.permute.xlu0 %639
    %v642 = vmul.f32 %v635, %v640
    %644 = vrot.lane.b32.xlu0 %v642, 32
    %v645 = vpop.permute.xlu0 %644
    %v647 = vadd.f32 %v637, %v645
    %v648 = vtanh.pop %v647
    %650 = vrot.lane.b32.xlu0 %v648, 64
    %v651 = vpop.permute.xlu0 %650
    %v653 = vmul.f32 %v635, %v651
    %s654 = scalar_lea.vmem [#allocation2], 48
    %v655 = vld [vmem:[%s654] sm:$0xff]
    %657 = vrot.lane.b32.xlu0 %v653, 32
    %v658 = vpop.permute.xlu0 %657
    %v659 = vsel %vm45, %v658, 0
    %661 = vmatprep.subr.mxu0 0.0
    %662 = vmatpush1.msra.mxu0 %v40
    %663 = vmatprep.subr.mxu0 0.0
    %664 = vmatpush1.msra.mxu0 %v41
    %665 = vmatprep.subr.mxu0 0.0
    %666 = vmatpush1.msra.mxu0 %v42
    %667 = vmatprep.subr.mxu0 0.0
    %668 = vmatpush1.msra.mxu0 %v43
    %669 = vmatprep.subr.mxu0 0.0
    %670 = vmatpush1.msra.mxu0 0.0
    %671 = vmatprep.subr.mxu0 0.0
    %672 = vmatpush1.msra.mxu0 0.0
    %673 = vmatprep.subr.mxu0 0.0
    %674 = vmatpush1.msra.mxu0 0.0
    %675 = vmatprep.subr.mxu0 0.0
    %676 = vmatpush1.msra.mxu0 0.0
    %677 = vmatprep.subr.mxu0 0.0
    %678 = vmatpush1.msra.mxu0 0.0
    %679 = vmatprep.subr.mxu0 0.0
    %680 = vmatpush1.msra.mxu0 0.0
    %681 = vmatprep.subr.mxu0 0.0
    %682 = vmatpush1.msra.mxu0 0.0
    %683 = vmatprep.subr.mxu0 0.0
    %684 = vmatpush1.msra.mxu0 0.0
    %685 = vmatprep.subr.mxu0 0.0
    %686 = vmatpush1.msra.mxu0 0.0
    %687 = vmatprep.subr.mxu0 0.0
    %688 = vmatpush1.msra.mxu0 0.0
    %689 = vmatprep.subr.mxu0 0.0
    %690 = vmatpush1.msra.mxu0 0.0
    %691 = vmatprep.subr.mxu0 0.0
    %692 = vmatpush1.msra.mxu0 0.0
    %693 = vmatprep.subr.mxu0 0.0
    %694 = vmatpush1.msra.mxu0 0.0
    %695 = vmatprep.subr.mxu0 0.0
    %696 = vmatpush1.msra.mxu0 0.0
    %697 = vmatprep.subr.mxu0 0.0
    %698 = vmatpush1.msra.mxu0 0.0
    %699 = vmatprep.subr.mxu0 0.0
    %700 = vmatpush1.msra.mxu0 0.0
    %701 = vmatprep.subr.mxu0 0.0
    %702 = vmatpush1.msra.mxu0 0.0
    %703 = vmatprep.subr.mxu0 0.0
    %704 = vmatpush1.msra.mxu0 0.0
    %705 = vmatprep.subr.mxu0 0.0
    %706 = vmatpush1.msra.mxu0 0.0
    %707 = vmatprep.subr.mxu0 0.0
    %708 = vmatpush1.msra.mxu0 0.0
    %709 = vmatprep.subr.mxu0 0.0
    %710 = vmatpush1.msra.mxu0 0.0
    %711 = vmatprep.subr.mxu0 0.0
    %712 = vmatpush1.msra.mxu0 0.0
    %713 = vmatprep.subr.mxu0 0.0
    %714 = vmatpush1.msra.mxu0 0.0
    %715 = vmatprep.subr.mxu0 0.0
    %716 = vmatpush1.msra.mxu0 0.0
    %717 = vmatprep.subr.mxu0 0.0
    %718 = vmatpush1.msra.mxu0 0.0
    %719 = vmatprep.subr.mxu0 0.0
    %720 = vmatpush1.msra.mxu0 0.0
    %721 = vmatprep.subr.mxu0 0.0
    %722 = vmatpush1.msra.mxu0 0.0
    %723 = vmatprep.subr.mxu0 0.0
    %724 = vmatpush1.msra.mxu0 0.0
    %725 = vmatprep.mubr.f32.mxu0 0.0
    %726 = vmatmul.mubr.f32.gmra.mrb[0].mxu0 %v659
    %v727 = vpop.f32.mrb[0].mxu0
    %v728 = vadd.f32 0.0, %v727
    %v729 = vpop.f32.mrb[0].mxu0
    %730 = vdwg.mxu0
    %v731 = vadd.f32 %v655, %v728
    %v732 = vxor.u32 %v731, 2147483648
    %v733 = vmul.f32 %v732, 1.442695
    %v734 = vpow.pop %v733
    %v735 = vadd.f32 %v734, 1.0
    %v736 = vrcp.pop %v735
    %v737 = vmul.f32 1.0, %v736
    %v738 = vtanh.pop %v731
    %v739 = vmul.f32 %v737, %v647
    %741 = vrot.lane.b32.xlu0 %v738, 64
    %v742 = vpop.permute.xlu0 %741
    %v744 = vmul.f32 %v737, %v742
    %746 = vrot.lane.b32.xlu0 %v744, 32
    %v747 = vpop.permute.xlu0 %746
    %v749 = vadd.f32 %v739, %v747
    %v750 = vtanh.pop %v749
    %752 = vrot.lane.b32.xlu0 %v750, 64
    %v753 = vpop.permute.xlu0 %752
    %v755 = vmul.f32 %v737, %v753
    %s756 = scalar_lea.vmem [#allocation2], 56
    %v757 = vld [vmem:[%s756] sm:$0xff]
    %759 = vrot.lane.b32.xlu0 %v755, 32
    %v760 = vpop.permute.xlu0 %759
    %v761 = vsel %vm45, %v760, 0
    %763 = vmatprep.subr.mxu0 0.0
    %764 = vmatpush1.msra.mxu0 %v40
    %765 = vmatprep.subr.mxu0 0.0
    %766 = vmatpush1.msra.mxu0 %v41
    %767 = vmatprep.subr.mxu0 0.0
    %768 = vmatpush1.msra.mxu0 %v42
    %769 = vmatprep.subr.mxu0 0.0
    %770 = vmatpush1.msra.mxu0 %v43
    %771 = vmatprep.subr.mxu0 0.0
    %772 = vmatpush1.msra.mxu0 0.0
    %773 = vmatprep.subr.mxu0 0.0
    %774 = vmatpush1.msra.mxu0 0.0
    %775 = vmatprep.subr.mxu0 0.0
    %776 = vmatpush1.msra.mxu0 0.0
    %777 = vmatprep.subr.mxu0 0.0
    %778 = vmatpush1.msra.mxu0 0.0
    %779 = vmatprep.subr.mxu0 0.0
    %780 = vmatpush1.msra.mxu0 0.0
    %781 = vmatprep.subr.mxu0 0.0
    %782 = vmatpush1.msra.mxu0 0.0
    %783 = vmatprep.subr.mxu0 0.0
    %784 = vmatpush1.msra.mxu0 0.0
    %785 = vmatprep.subr.mxu0 0.0
    %786 = vmatpush1.msra.mxu0 0.0
    %787 = vmatprep.subr.mxu0 0.0
    %788 = vmatpush1.msra.mxu0 0.0
    %789 = vmatprep.subr.mxu0 0.0
    %790 = vmatpush1.msra.mxu0 0.0
    %791 = vmatprep.subr.mxu0 0.0
    %792 = vmatpush1.msra.mxu0 0.0
    %793 = vmatprep.subr.mxu0 0.0
    %794 = vmatpush1.msra.mxu0 0.0
    %795 = vmatprep.subr.mxu0 0.0
    %796 = vmatpush1.msra.mxu0 0.0
    %797 = vmatprep.subr.mxu0 0.0
    %798 = vmatpush1.msra.mxu0 0.0
    %799 = vmatprep.subr.mxu0 0.0
    %800 = vmatpush1.msra.mxu0 0.0
    %801 = vmatprep.subr.mxu0 0.0
    %802 = vmatpush1.msra.mxu0 0.0
    %803 = vmatprep.subr.mxu0 0.0
    %804 = vmatpush1.msra.mxu0 0.0
    %805 = vmatprep.subr.mxu0 0.0
    %806 = vmatpush1.msra.mxu0 0.0
    %807 = vmatprep.subr.mxu0 0.0
    %808 = vmatpush1.msra.mxu0 0.0
    %809 = vmatprep.subr.mxu0 0.0
    %810 = vmatpush1.msra.mxu0 0.0
    %811 = vmatprep.subr.mxu0 0.0
    %812 = vmatpush1.msra.mxu0 0.0
    %813 = vmatprep.subr.mxu0 0.0
    %814 = vmatpush1.msra.mxu0 0.0
    %815 = vmatprep.subr.mxu0 0.0
    %816 = vmatpush1.msra.mxu0 0.0
    %817 = vmatprep.subr.mxu0 0.0
    %818 = vmatpush1.msra.mxu0 0.0
    %819 = vmatprep.subr.mxu0 0.0
    %820 = vmatpush1.msra.mxu0 0.0
    %821 = vmatprep.subr.mxu0 0.0
    %822 = vmatpush1.msra.mxu0 0.0
    %823 = vmatprep.subr.mxu0 0.0
    %824 = vmatpush1.msra.mxu0 0.0
    %825 = vmatprep.subr.mxu0 0.0
    %826 = vmatpush1.msra.mxu0 0.0
    %827 = vmatprep.mubr.f32.mxu0 0.0
    %828 = vmatmul.mubr.f32.gmra.mrb[0].mxu0 %v761
    %v829 = vpop.f32.mrb[0].mxu0
    %v830 = vadd.f32 0.0, %v829
    %v831 = vpop.f32.mrb[0].mxu0
    %832 = vdwg.mxu0
    %v833 = vadd.f32 %v757, %v830
    %v834 = vxor.u32 %v833, 2147483648
    %v835 = vmul.f32 %v834, 1.442695
    %v836 = vpow.pop %v835
    %v837 = vadd.f32 %v836, 1.0
    %v838 = vrcp.pop %v837
    %v839 = vmul.f32 1.0, %v838
    %v840 = vtanh.pop %v833
    %v841 = vmul.f32 %v839, %v749
    %843 = vrot.lane.b32.xlu0 %v840, 64
    %v844 = vpop.permute.xlu0 %843
    %v846 = vmul.f32 %v839, %v844
    %848 = vrot.lane.b32.xlu0 %v846, 32
    %v849 = vpop.permute.xlu0 %848
    %v851 = vadd.f32 %v841, %v849
    %v852 = vtanh.pop %v851
    %854 = vrot.lane.b32.xlu0 %v852, 64
    %v855 = vpop.permute.xlu0 %854
    %v857 = vmul.f32 %v839, %v855
    %859 = vrot.lane.b32.xlu0 %v857, 32
    %v860 = vpop.permute.xlu0 %859
    %862 = vst.msk [vmem:[#allocation7] sm:$0xff] %vm45, %v860
    // Predicated region
    $region18: #{tpu_custom_call.1} parent=1 // pred_check
      _
    $region19: #{tpu_custom_call.1} parent=1 // pred_check_branch
      %864 = sbr.rel (0) target = $region21
    $region20: #{tpu_custom_call.1} parent=1 // pred_region
      %s866 = ssub.s32 128, 128
      %867 = vsyncadd [#allocation4], %s866
      %s869 = sshll.u32 [#allocation7], 4
      %s870 = int_to_ptr.vmem [resolvable:$true] %s869
      %872 = dma.vmem_to_hbm [thread:$0]  %s870, 128, %s2, [#allocation4]
    $region21: #{tpu_custom_call.1} parent=1 // pred_fallthru
      _
    // Predicated region
    $region22: #{tpu_custom_call.1} parent=1 // pred_check
      _
    $region23: #{tpu_custom_call.1} parent=1 // pred_check_branch
      %874 = sbr.rel (0) target = $region25
    $region24: #{tpu_custom_call.1} parent=1 // pred_region
      %875 = dma.done [#allocation4], 128
    $region25: #{tpu_custom_call.1} parent=1 // pred_fallthru
      _
    %876 = vsyncpa [#allocation3], 1
    %877 = vsyncpa [#allocation6], 1
    %878 = vsyncpa [#allocation4], 1

</llo_original>
